<compile_context>
chip_gen: v6e
topology: v6e:2x2x1
jax: 0.10.0
libtpu: 0.0.40
codegen_flags: <defaults>
</compile_context>

<pallas_src>
import functools

import jax
import jax.numpy as jnp
from jax.experimental import pallas as pl
from jax.experimental.pallas import tpu as pltpu


def cfg_kernel(x_ref, w_ref, out_ref):
    """Fused CFG denoise step on one sublane/lane-dense block.

    x_ref  : VMEM (N*C, HW)       image rows, batch folded into sublanes
    w_ref  : VMEM (N*C, N*C + 1)  block-diagonal channel mix with the per-batch
                                  sigma preconditioner folded in; last column is
                                  the CFG-combined conditioning + bias
    out_ref: VMEM (N*C, HW)
    """
    nc, hw = x_ref.shape
    x = x_ref[...]                 # (NC, HW)
    w = w_ref[...]                 # (NC, NC + 1)

    # Seed the accumulator with the conditioning/bias column (lane broadcast).
    acc = jnp.broadcast_to(w[:, nc:nc + 1], (nc, hw))

    # Channel mix as scalar-broadcast FMAs on the VPU: column j of the
    # block-diagonal weight (lane-broadcast) times row j of x (sublane-
    # broadcast).  Exact f32, no MXU issue/pop latency for a 4x4 contraction.
    for j in range(nc):
        acc = acc + w[:, j:j + 1] * x[j:j + 1, :]

    out_ref[...] = acc.astype(out_ref.dtype)
    # TODO(synk): thresholder is None in this configuration; no thresholding applied.


@functools.partial(jax.jit, static_argnames=("cond_scale",))
def stable_interface_forward(x, sigma, uncond, cond, cond_scale, params):
    """x: (N, C, H, W) f32, sigma: (N,), uncond/cond: (N, D), cond_scale: float."""
    W_mix, W_cond, bias = params
    N, C, H, W = x.shape
    HW = H * W
    NC = N * C
    hi = jax.lax.Precision.HIGHEST

    # ---- tiny wrapper precompute (fused under jit, ~N*C*C floats total) ----
    # sigma preconditioner folded into the per-batch channel-mix weight
    c_in = jax.lax.rsqrt(sigma * sigma + 1.0)                       # (N,)
    wt = jnp.transpose(W_mix)                                       # (C_out, C_in)
    blocks = wt[None, :, :] * c_in[:, None, None]                   # (N, C, C)

    # Both CFG branches share the image path (sigma duplicated, conditioning is
    # purely additive in this inner model), so combine the conditioning now:
    emb_u = jnp.dot(uncond, W_cond, precision=hi)                   # (N, C)
    emb_c = jnp.dot(cond, W_cond, precision=hi)                     # (N, C)
    emb_cfg = bias + emb_u + (emb_c - emb_u) * cond_scale           # (N, C)

    # Block-diagonal (N*C, N*C) weight so the whole batch is ONE dense block;
    # append emb_cfg as an extra column (consumed as the accumulator seed).
    eye_n = jnp.eye(N, dtype=x.dtype)
    w_big = (eye_n[:, None, :, None] * blocks[:, :, None, :]).reshape(NC, NC)
    w_aug = jnp.concatenate([w_big, emb_cfg.reshape(NC, 1)], axis=1)  # (NC, NC+1)

    # NCHW is already channel-major -> (N*C, HW); HW=256 lane-dense, N*C=8 fills
    # all f32 sublanes.  No transposes anywhere.
    x_flat = x.reshape(NC, HW)

    out = pl.pallas_call(
        cfg_kernel,
        out_shape=jax.ShapeDtypeStruct((NC, HW), x.dtype),
        in_specs=[
            pl.BlockSpec(memory_space=pltpu.MemorySpace.VMEM),   # x block
            pl.BlockSpec(memory_space=pltpu.MemorySpace.VMEM),   # folded weight
        ],
        out_specs=pl.BlockSpec(memory_space=pltpu.MemorySpace.VMEM),
    )(x_flat, w_aug)
    # TODO(synk): for real latent sizes (C>=256, HW>=4096) add an HW grid axis
    # with <=2048-lane blocks (and megacore sharding); at this size a single
    # grid-less block is fastest and trivially fits VMEM on v5e/v6e/v7x.

    return out.reshape(N, C, H, W)


def ref_forward(x, sigma, uncond, cond, cond_scale, params):
    """Pure-JAX reference mirroring the PyTorch cat/chunk structure."""
    W_mix, W_cond, bias = params
    hi = jax.lax.Precision.HIGHEST

    def inner(xb, sigb, condb):
        N, C, H, W = xb.shape
        c_in = 1.0 / jnp.sqrt(sigb ** 2 + 1.0)
        xf = jnp.transpose(xb, (0, 2, 3, 1)).reshape(N, H * W, C)
        h = jnp.einsum("npc,cd->npd", xf * c_in[:, None, None], W_mix, precision=hi)
        emb = jnp.dot(condb, W_cond, precision=hi)
        out = h + emb[:, None, :] + bias
        return jnp.transpose(out.reshape(N, H, W, C), (0, 3, 1, 2))

    x_two = jnp.concatenate([x, x])
    sigma_two = jnp.concatenate([sigma, sigma])
    cond_full = jnp.concatenate([uncond, cond])
    out = inner(x_two, sigma_two, cond_full)
    u, c = jnp.split(out, 2)
    return u + (c - u) * cond_scale


if __name__ == "__main__":
    N, C, H, W, D = 2, 4, 16, 16, 32
    key = jax.random.PRNGKey(0)
    k1, k2, k3, k4, k5, k6, k7 = jax.random.split(key, 7)

    x = jax.random.normal(k1, (N, C, H, W), dtype=jnp.float32)
    sigma = jax.random.uniform(k2, (N,), dtype=jnp.float32, minval=0.5, maxval=5.0)
    uncond = jax.random.normal(k3, (N, D), dtype=jnp.float32)
    cond = jax.random.normal(k4, (N, D), dtype=jnp.float32)
    cond_scale = 7.5

    # deterministic synthetic inner-model parameters
    W_mix = jax.random.normal(k5, (C, C), dtype=jnp.float32) * 0.5
    W_cond = jax.random.normal(k6, (D, C), dtype=jnp.float32) * 0.1
    bias = jax.random.normal(k7, (1, C), dtype=jnp.float32) * 0.01
    params = (W_mix, W_cond, bias)

    out = stable_interface_forward(x, sigma, uncond, cond, cond_scale, params)
    out = jax.block_until_ready(out)

    ref = ref_forward(x, sigma, uncond, cond, cond_scale, params)
    assert out.shape == (N, C, H, W)
    assert jnp.allclose(out, ref, rtol=1e-5, atol=1e-5), "mismatch vs JAX reference"

    print("KERNEL_OK")
</pallas_src>

<mosaic_0001>
module attributes {stable_mosaic.version = 11 : i64} {
  func.func @cfg_kernel(%arg0: memref<8x256xf32, #tpu.memory_space<vmem>>, %arg1: memref<8x9xf32, #tpu.memory_space<vmem>>, %arg2: memref<8x256xf32, #tpu.memory_space<vmem>>) attributes {dimension_semantics = [], scalar_prefetch = 0 : i64, scratch_operands = 0 : i64, tpu.core_type = #tpu.core_type<tc>} {
    %c0 = arith.constant 0 : index
    %c0_0 = arith.constant 0 : index
    %0 = vector.load %arg0[%c0, %c0_0] : memref<8x256xf32, #tpu.memory_space<vmem>>, vector<8x256xf32>
    %c0_1 = arith.constant 0 : index
    %c0_2 = arith.constant 0 : index
    %1 = vector.load %arg1[%c0_1, %c0_2] : memref<8x9xf32, #tpu.memory_space<vmem>>, vector<8x9xf32>
    %2 = vector.extract_strided_slice %1 {offsets = [0, 8], sizes = [8, 1], strides = [1, 1]} : vector<8x9xf32> to vector<8x1xf32>
    %3 = vector.shape_cast %2 : vector<8x1xf32> to vector<8x1xf32>
    %4 = vector.broadcast %3 : vector<8x1xf32> to vector<8x256xf32>
    %5 = vector.extract_strided_slice %1 {offsets = [0, 0], sizes = [8, 1], strides = [1, 1]} : vector<8x9xf32> to vector<8x1xf32>
    %6 = vector.extract_strided_slice %0 {offsets = [0, 0], sizes = [1, 256], strides = [1, 1]} : vector<8x256xf32> to vector<1x256xf32>
    %7 = vector.broadcast %5 : vector<8x1xf32> to vector<8x256xf32>
    %8 = vector.broadcast %6 : vector<1x256xf32> to vector<8x256xf32>
    %9 = arith.mulf %7, %8 : vector<8x256xf32>
    %10 = arith.addf %4, %9 : vector<8x256xf32>
    %11 = vector.extract_strided_slice %1 {offsets = [0, 1], sizes = [8, 1], strides = [1, 1]} : vector<8x9xf32> to vector<8x1xf32>
    %12 = vector.extract_strided_slice %0 {offsets = [1, 0], sizes = [1, 256], strides = [1, 1]} : vector<8x256xf32> to vector<1x256xf32>
    %13 = vector.broadcast %11 : vector<8x1xf32> to vector<8x256xf32>
    %14 = vector.broadcast %12 : vector<1x256xf32> to vector<8x256xf32>
    %15 = arith.mulf %13, %14 : vector<8x256xf32>
    %16 = arith.addf %10, %15 : vector<8x256xf32>
    %17 = vector.extract_strided_slice %1 {offsets = [0, 2], sizes = [8, 1], strides = [1, 1]} : vector<8x9xf32> to vector<8x1xf32>
    %18 = vector.extract_strided_slice %0 {offsets = [2, 0], sizes = [1, 256], strides = [1, 1]} : vector<8x256xf32> to vector<1x256xf32>
    %19 = vector.broadcast %17 : vector<8x1xf32> to vector<8x256xf32>
    %20 = vector.broadcast %18 : vector<1x256xf32> to vector<8x256xf32>
    %21 = arith.mulf %19, %20 : vector<8x256xf32>
    %22 = arith.addf %16, %21 : vector<8x256xf32>
    %23 = vector.extract_strided_slice %1 {offsets = [0, 3], sizes = [8, 1], strides = [1, 1]} : vector<8x9xf32> to vector<8x1xf32>
    %24 = vector.extract_strided_slice %0 {offsets = [3, 0], sizes = [1, 256], strides = [1, 1]} : vector<8x256xf32> to vector<1x256xf32>
    %25 = vector.broadcast %23 : vector<8x1xf32> to vector<8x256xf32>
    %26 = vector.broadcast %24 : vector<1x256xf32> to vector<8x256xf32>
    %27 = arith.mulf %25, %26 : vector<8x256xf32>
    %28 = arith.addf %22, %27 : vector<8x256xf32>
    %29 = vector.extract_strided_slice %1 {offsets = [0, 4], sizes = [8, 1], strides = [1, 1]} : vector<8x9xf32> to vector<8x1xf32>
    %30 = vector.extract_strided_slice %0 {offsets = [4, 0], sizes = [1, 256], strides = [1, 1]} : vector<8x256xf32> to vector<1x256xf32>
    %31 = vector.broadcast %29 : vector<8x1xf32> to vector<8x256xf32>
    %32 = vector.broadcast %30 : vector<1x256xf32> to vector<8x256xf32>
    %33 = arith.mulf %31, %32 : vector<8x256xf32>
    %34 = arith.addf %28, %33 : vector<8x256xf32>
    %35 = vector.extract_strided_slice %1 {offsets = [0, 5], sizes = [8, 1], strides = [1, 1]} : vector<8x9xf32> to vector<8x1xf32>
    %36 = vector.extract_strided_slice %0 {offsets = [5, 0], sizes = [1, 256], strides = [1, 1]} : vector<8x256xf32> to vector<1x256xf32>
    %37 = vector.broadcast %35 : vector<8x1xf32> to vector<8x256xf32>
    %38 = vector.broadcast %36 : vector<1x256xf32> to vector<8x256xf32>
    %39 = arith.mulf %37, %38 : vector<8x256xf32>
    %40 = arith.addf %34, %39 : vector<8x256xf32>
    %41 = vector.extract_strided_slice %1 {offsets = [0, 6], sizes = [8, 1], strides = [1, 1]} : vector<8x9xf32> to vector<8x1xf32>
    %42 = vector.extract_strided_slice %0 {offsets = [6, 0], sizes = [1, 256], strides = [1, 1]} : vector<8x256xf32> to vector<1x256xf32>
    %43 = vector.broadcast %41 : vector<8x1xf32> to vector<8x256xf32>
    %44 = vector.broadcast %42 : vector<1x256xf32> to vector<8x256xf32>
    %45 = arith.mulf %43, %44 : vector<8x256xf32>
    %46 = arith.addf %40, %45 : vector<8x256xf32>
    %47 = vector.extract_strided_slice %1 {offsets = [0, 7], sizes = [8, 1], strides = [1, 1]} : vector<8x9xf32> to vector<8x1xf32>
    %48 = vector.extract_strided_slice %0 {offsets = [7, 0], sizes = [1, 256], strides = [1, 1]} : vector<8x256xf32> to vector<1x256xf32>
    %49 = vector.broadcast %47 : vector<8x1xf32> to vector<8x256xf32>
    %50 = vector.broadcast %48 : vector<1x256xf32> to vector<8x256xf32>
    %51 = arith.mulf %49, %50 : vector<8x256xf32>
    %52 = arith.addf %46, %51 : vector<8x256xf32>
    %c0_3 = arith.constant 0 : index
    %c0_4 = arith.constant 0 : index
    %53 = vector.load %arg2[%c0_3, %c0_4] : memref<8x256xf32, #tpu.memory_space<vmem>>, vector<8x256xf32>
    tpu.vector_store %arg2[%c0_3, %c0_4], %52 {strides = array<i32>} : memref<8x256xf32, #tpu.memory_space<vmem>>, vector<8x256xf32>,
    return
  }
}

</mosaic_0001>

<llo_original>
// kernel: stable_interface_forward.1
$region0: #{stable_interface_forward.1}
  #allocation0 [shape = 'u32[]', space=smem, size = 0x4, offset = 0x4, fixed_abs, tag = 'smem constant byte address 0x4 - core index']
  #allocation1 [shape = 'u32[144,128]{1,0:T(1,128)}', space=vmem, size = 0x12000, scoped, tag = 'internal scratch']
  %s0 = inlined_call_operand.vmem [shape: f32[8,256], index: 0, kind: input, shape index: {}]
  %s1 = inlined_call_operand.vmem [shape: f32[8,9], index: 1, kind: input, shape index: {}]
  %s2 = inlined_call_operand.vmem [shape: f32[8,256], index: 2, kind: output, shape index: {}]
  %s3 = sld [smem:[#allocation0]]
  $region18: #{stable_interface_forward.1} parent=0
    _
  %s5 = ssub.s32 1, %s3
  %s6 = scalar_select 0, %s5, %s3
  // Predicated region
  $region2: #{stable_interface_forward.1} parent=0 // pred_check
    _
  $region3: #{stable_interface_forward.1} parent=0 // pred_check_branch
    %8 = sbr.rel (0) target = $region5
  $region4: #{stable_interface_forward.1} parent=0 // pred_region
    _
  $region5: #{stable_interface_forward.1} parent=0 // pred_fallthru
    _
  // Predicated region
  $region6: #{stable_interface_forward.1} parent=0 // pred_check
    _
  $region7: #{stable_interface_forward.1} parent=0 // pred_check_branch
    %10 = sbr.rel (0) target = $region9
  $region8: #{stable_interface_forward.1} parent=0 // pred_region
    _
  $region9: #{stable_interface_forward.1} parent=0 // pred_fallthru
    _
  %v11 = vld [vmem:[%s0] sm:$0xff]
  %v12 = vld [vmem:[%s0 + $0x8] sm:$0xff]
  %v13 = vld [vmem:[%s1] sm:$0xff]
  %15 = vset.pattern.permute.xlu0 8
  %16 = vperm.xlu0 %15, %v13
  %v17 = vpop.permute.xlu0 %16
  %19 = vset.pattern.permute.xlu0 0
  %20 = vperm.xlu0 %19, %v13
  %v21 = vpop.permute.xlu0 %20
  %v23 = vlaneseq
  %v24 = vshrl.u32 %v23, 7
  %v25 = vsub.s32 0, %v24
  %v26 = vrot.slane %v11, %v25
  %v27 = vlaneseq
  %v28 = vshrl.u32 %v27, 7
  %v29 = vsub.s32 0, %v28
  %v30 = vrot.slane %v12, %v29
  %v31 = vmul.f32 %v21, %v26
  %v32 = vmul.f32 %v21, %v30
  %v33 = vadd.f32 %v17, %v31
  %v34 = vadd.f32 %v17, %v32
  %35 = vset.pattern.permute.xlu0 1
  %36 = vperm.xlu0 %35, %v13
  %v37 = vpop.permute.xlu0 %36
  %v39 = vlaneseq
  %v40 = vshrl.u32 %v39, 7
  %v41 = vsub.s32 1, %v40
  %v42 = vrot.slane %v11, %v41
  %v43 = vlaneseq
  %v44 = vshrl.u32 %v43, 7
  %v45 = vsub.s32 1, %v44
  %v46 = vrot.slane %v12, %v45
  %v47 = vmul.f32 %v37, %v42
  %v48 = vmul.f32 %v37, %v46
  %v49 = vadd.f32 %v33, %v47
  %v50 = vadd.f32 %v34, %v48
  %51 = vset.pattern.permute.xlu0 2
  %52 = vperm.xlu0 %51, %v13
  %v53 = vpop.permute.xlu0 %52
  %v55 = vlaneseq
  %v56 = vshrl.u32 %v55, 7
  %v57 = vsub.s32 2, %v56
  %v58 = vrot.slane %v11, %v57
  %v59 = vlaneseq
  %v60 = vshrl.u32 %v59, 7
  %v61 = vsub.s32 2, %v60
  %v62 = vrot.slane %v12, %v61
  %v63 = vmul.f32 %v53, %v58
  %v64 = vmul.f32 %v53, %v62
  %v65 = vadd.f32 %v49, %v63
  %v66 = vadd.f32 %v50, %v64
  %67 = vset.pattern.permute.xlu0 3
  %68 = vperm.xlu0 %67, %v13
  %v69 = vpop.permute.xlu0 %68
  %v71 = vlaneseq
  %v72 = vshrl.u32 %v71, 7
  %v73 = vsub.s32 3, %v72
  %v74 = vrot.slane %v11, %v73
  %v75 = vlaneseq
  %v76 = vshrl.u32 %v75, 7
  %v77 = vsub.s32 3, %v76
  %v78 = vrot.slane %v12, %v77
  %v79 = vmul.f32 %v69, %v74
  %v80 = vmul.f32 %v69, %v78
  %v81 = vadd.f32 %v65, %v79
  %v82 = vadd.f32 %v66, %v80
  %83 = vset.pattern.permute.xlu0 4
  %84 = vperm.xlu0 %83, %v13
  %v85 = vpop.permute.xlu0 %84
  %v87 = vlaneseq
  %v88 = vshrl.u32 %v87, 7
  %v89 = vsub.s32 4, %v88
  %v90 = vrot.slane %v11, %v89
  %v91 = vlaneseq
  %v92 = vshrl.u32 %v91, 7
  %v93 = vsub.s32 4, %v92
  %v94 = vrot.slane %v12, %v93
  %v95 = vmul.f32 %v85, %v90
  %v96 = vmul.f32 %v85, %v94
  %v97 = vadd.f32 %v81, %v95
  %v98 = vadd.f32 %v82, %v96
  %99 = vset.pattern.permute.xlu0 5
  %100 = vperm.xlu0 %99, %v13
  %v101 = vpop.permute.xlu0 %100
  %v103 = vlaneseq
  %v104 = vshrl.u32 %v103, 7
  %v105 = vsub.s32 5, %v104
  %v106 = vrot.slane %v11, %v105
  %v107 = vlaneseq
  %v108 = vshrl.u32 %v107, 7
  %v109 = vsub.s32 5, %v108
  %v110 = vrot.slane %v12, %v109
  %v111 = vmul.f32 %v101, %v106
  %v112 = vmul.f32 %v101, %v110
  %v113 = vadd.f32 %v97, %v111
  %v114 = vadd.f32 %v98, %v112
  %115 = vset.pattern.permute.xlu0 6
  %116 = vperm.xlu0 %115, %v13
  %v117 = vpop.permute.xlu0 %116
  %v119 = vlaneseq
  %v120 = vshrl.u32 %v119, 7
  %v121 = vsub.s32 6, %v120
  %v122 = vrot.slane %v11, %v121
  %v123 = vlaneseq
  %v124 = vshrl.u32 %v123, 7
  %v125 = vsub.s32 6, %v124
  %v126 = vrot.slane %v12, %v125
  %v127 = vmul.f32 %v117, %v122
  %v128 = vmul.f32 %v117, %v126
  %v129 = vadd.f32 %v113, %v127
  %v130 = vadd.f32 %v114, %v128
  %131 = vset.pattern.permute.xlu0 7
  %132 = vperm.xlu0 %131, %v13
  %v133 = vpop.permute.xlu0 %132
  %v135 = vlaneseq
  %v136 = vshrl.u32 %v135, 7
  %v137 = vsub.s32 7, %v136
  %v138 = vrot.slane %v11, %v137
  %v139 = vlaneseq
  %v140 = vshrl.u32 %v139, 7
  %v141 = vsub.s32 7, %v140
  %v142 = vrot.slane %v12, %v141
  %v143 = vmul.f32 %v133, %v138
  %v144 = vmul.f32 %v133, %v142
  %v145 = vadd.f32 %v129, %v143
  %v146 = vadd.f32 %v130, %v144
  %147 = vst [vmem:[%s2] sm:$0xff] %v145
  %148 = vst [vmem:[%s2 + $0x8] sm:$0xff] %v146
  // Predicated region
  $region10: #{stable_interface_forward.1} parent=0 // pred_check
    _
  $region11: #{stable_interface_forward.1} parent=0 // pred_check_branch
    %150 = sbr.rel (0) target = $region13
  $region12: #{stable_interface_forward.1} parent=0 // pred_region
    _
  $region13: #{stable_interface_forward.1} parent=0 // pred_fallthru
    _
  // Predicated region
  $region14: #{stable_interface_forward.1} parent=0 // pred_check
    _
  $region15: #{stable_interface_forward.1} parent=0 // pred_check_branch
    %152 = sbr.rel (0) target = $region17
  $region16: #{stable_interface_forward.1} parent=0 // pred_region
    _
  $region17: #{stable_interface_forward.1} parent=0 // pred_fallthru
    _

</llo_original>
